<compile_context>
chip_gen: v7x
topology: tpu7x:2x2x1
jax: 0.10.0
libtpu: 0.0.40
codegen_flags: <defaults>
</compile_context>

<pallas_src>
import functools

import jax
import jax.numpy as jnp
from jax.experimental import pallas as pl
from jax.experimental.pallas import tpu as pltpu

_MiB = 1024 * 1024


def _round_up(x, m):
    return ((x + m - 1) // m) * m


def _vmem_capacity_bytes():
    try:
        return int(pltpu.get_tpu_info().vmem_capacity_bytes)
    except Exception:
        return 64 * _MiB  # conservative fallback: v7x per-TC VMEM


@functools.cache
def _buffered_one_supported():
    """Feature-probe: single-buffered constant blocks (pl.Buffered(1))."""
    def _copy(x_ref, o_ref):
        o_ref[...] = x_ref[...]

    try:
        fn = pl.pallas_call(
            _copy,
            out_shape=jax.ShapeDtypeStruct((8, 128), jnp.float32),
            grid=(1,),
            in_specs=[pl.BlockSpec((8, 128), lambda i: (0, 0),
                                   pipeline_mode=pl.Buffered(1))],
            out_specs=pl.BlockSpec((8, 128), lambda i: (0, 0)),
        )
        jax.block_until_ready(fn(jnp.zeros((8, 128), jnp.float32)))
        return True
    except Exception:
        return False


def _proj_kernel(x_ref, w_ref, b_ref, o_ref):
    # x_ref: (tm, K) f32, w_ref: (K, tn) bf16, b_ref: (1, tn) f32, o_ref: (tm, tn)
    x = x_ref[...].astype(jnp.bfloat16)  # cast in-kernel; hidden under the DMA
    acc = jnp.dot(x, w_ref[...], preferred_element_type=jnp.float32)
    o_ref[...] = (acc + b_ref[...]).astype(o_ref.dtype)


def _choose_tiles(M, K, N_pad, x_bytes, o_bytes, w_bytes):
    """Pick (tm, tn), whether constant blocks may be single-buffered, and the
    scoped VMEM limit, from a generation-aware VMEM budget."""
    cap = _vmem_capacity_bytes()
    # ~72% of VMEM on 128 MiB chips (v5e/v6e), ~60% on 64 MiB chips (v7x).
    budget = int(cap * (0.72 if cap >= 96 * _MiB else 0.60))
    vmem_limit = min(cap - 8 * _MiB, budget + 16 * _MiB)

    can_single_buffer = _buffered_one_supported()
    w_full = K * N_pad * w_bytes + N_pad * 4  # weight + bias, one buffer

    if can_single_buffer and w_full <= budget // 2:
        tn, w_vmem, buffered_const = N_pad, w_full, True
    elif 2 * w_full <= budget // 2:
        tn, w_vmem, buffered_const = N_pad, 2 * w_full, False
    else:
        # Resident weight does not fit: stream weight columns via an N grid dim
        # (largest multiple-of-128 divisor of N_pad that fits double-buffered).
        buffered_const = False
        q = N_pad // 128
        tn = 128
        for d in range(q, 0, -1):
            if q % d == 0 and 2 * (K * 128 * d * w_bytes + 128 * d * 4) <= budget // 2:
                tn = 128 * d
                break
        w_vmem = 2 * (K * tn * w_bytes + tn * 4)

    per_row = 2 * (K * x_bytes + tn * o_bytes)  # double-buffered x / out tiles
    tm = (budget - w_vmem) // per_row

    # Lane-width-aware cap: narrow output tiles need more rows to amortize the
    # ~0.35 us per-grid-step overhead (matters most on v7x's fast HBM).
    if tn <= 128:
        tm_cap = 4096
    elif tn <= 256:
        tm_cap = 2048
    else:
        tm_cap = 1024
    tm = min(tm, tm_cap)

    # Prefer >= 2 row-steps so both v7x TensorCores get work, but never shrink
    # tiles below 512 rows for it (single-TC v5e/v6e and small M keep one tile).
    half = _round_up((M + 1) // 2, 8)
    if half >= 512:
        tm = min(tm, half)

    tm = min(tm, _round_up(M, 8))
    tm = max(8, (tm // 8) * 8)
    return tm, tn, buffered_const, vmem_limit


def _projection(x_flat, w_flat, b_flat, *, out_dtype):
    """(M, K) f32 @ (K, N_pad) bf16 + bias -> (M, N_pad) out_dtype."""
    M, K = x_flat.shape
    Kw, N_pad = w_flat.shape
    assert K == Kw, (K, Kw)
    assert N_pad % 128 == 0, N_pad

    x_bytes = x_flat.dtype.itemsize
    w_bytes = w_flat.dtype.itemsize
    o_bytes = jnp.dtype(out_dtype).itemsize

    tm, tn, buffered_const, vmem_limit = _choose_tiles(
        M, K, N_pad, x_bytes, o_bytes, w_bytes)

    rows = pl.cdiv(M, tm)
    cols = N_pad // tn

    if buffered_const and cols == 1:
        # Constant-index blocks: double-buffering only burns VMEM.
        w_spec = pl.BlockSpec((K, tn), lambda i, j: (0, j),
                              pipeline_mode=pl.Buffered(1))
        b_spec = pl.BlockSpec((1, tn), lambda i, j: (0, j),
                              pipeline_mode=pl.Buffered(1))
    else:
        w_spec = pl.BlockSpec((K, tn), lambda i, j: (0, j))
        b_spec = pl.BlockSpec((1, tn), lambda i, j: (0, j))

    cost = pl.CostEstimate(
        flops=2 * M * K * N_pad,
        transcendentals=0,
        bytes_accessed=(x_bytes * M * K + w_bytes * K * N_pad + 4 * N_pad
                        + o_bytes * M * N_pad),
    )

    return pl.pallas_call(
        _proj_kernel,
        out_shape=jax.ShapeDtypeStruct((M, N_pad), out_dtype),
        grid_spec=pltpu.PrefetchScalarGridSpec(
            num_scalar_prefetch=0,
            grid=(rows, cols),
            in_specs=[
                pl.BlockSpec((tm, K), lambda i, j: (i, 0)),   # x rows (f32)
                w_spec,                                        # weight (bf16)
                b_spec,                                        # bias (f32)
            ],
            out_specs=pl.BlockSpec((tm, tn), lambda i, j: (i, j)),
        ),
        compiler_params=pltpu.CompilerParams(
            dimension_semantics=("parallel", "parallel"),
            vmem_limit_bytes=vmem_limit,
        ),
        cost_estimate=cost,
    )(x_flat, w_flat, b_flat)


class PatchRecoveryPallas:
    """JAX/Pallas equivalent of the PyTorch PatchRecovery module (eval mode)."""

    def __init__(self, d_model, c_out, patch_size, height, width, key,
                 dropout=0.0):
        self.d_model = d_model
        self.c_out = c_out
        self.patch_size = patch_size
        self.height = height
        self.width = width
        # TODO(synk): training-mode dropout not implemented (module default
        # p=0.0, and dropout is identity in eval mode).

        # nn.ConvTranspose2d weight layout: (in_channels, out_channels, kH, kW)
        kw, kb = jax.random.split(key)
        fan = d_model * patch_size * patch_size
        bound = 1.0 / (fan ** 0.5)
        self.weight = jax.random.uniform(
            kw, (d_model, c_out, patch_size, patch_size),
            minval=-bound, maxval=bound, dtype=jnp.float32)
        self.bias = jax.random.uniform(
            kb, (c_out,), minval=-bound, maxval=bound, dtype=jnp.float32)

        # ---- weight/bias prep done ONCE here (not per call) ----------------
        p = patch_size
        N = c_out * p * p
        self._n = N
        # columns ordered (i, j, c_out): channel innermost -> contiguous
        # epilogue copies instead of stride-p*p gathers
        w_cols = jnp.transpose(self.weight, (0, 2, 3, 1)).reshape(d_model, N)
        b_cols = jnp.tile(self.bias, p * p)

        # (a) lane-padded variant (unmasked 128-lane stores)
        N_pad = _round_up(N, 128)
        self._n_pad = N_pad
        w_p, b_p = w_cols, b_cols
        if N_pad != N:
            w_p = jnp.pad(w_cols, ((0, 0), (0, N_pad - N)))
            b_p = jnp.pad(b_cols, (0, N_pad - N))
        self._w_pad = w_p.astype(jnp.bfloat16)
        self._b_pad = b_p.reshape(1, N_pad).astype(jnp.float32)

        # (b) token-folded variant: when N divides 128, pack fold = 128//N
        # tokens per output row via a block-diagonal weight -> lane-dense
        # stores with zero wasted (padded-column) HBM writes.
        fold = 128 // N if (N < 128 and 128 % N == 0) else 1
        self._fold = fold
        if fold > 1:
            wf = jnp.zeros((fold * d_model, 128), dtype=w_cols.dtype)
            for f in range(fold):
                wf = wf.at[f * d_model:(f + 1) * d_model,
                           f * N:(f + 1) * N].set(w_cols)
            self._w_fold = wf.astype(jnp.bfloat16)
            self._b_fold = jnp.tile(b_cols, fold).reshape(1, 128).astype(jnp.float32)

    def __call__(self, x):
        # x: (B, T, h*w, d_model) with h = height // p, w = width // p
        p = self.patch_size
        h = self.height // p
        w = self.width // p
        B, T, HW, D = x.shape
        assert HW == h * w and D == self.d_model

        M = B * T * h * w
        out_dtype = x.dtype

        # No wrapper-side cast or pad of x: the kernel reads it as-is and casts
        # to bf16 in VMEM; ragged final row-block is clipped by Pallas.
        x_flat = x.reshape(M, D)

        fold = self._fold if (self._fold > 1 and M % self._fold == 0) else 1
        if fold > 1:
            y = _projection(x_flat.reshape(M // fold, fold * D),
                            self._w_fold, self._b_fold, out_dtype=out_dtype)
            y_flat = y.reshape(M, self._n)            # contiguous, free reshape
        else:
            y = _projection(x_flat, self._w_pad, self._b_pad,
                            out_dtype=out_dtype)
            y_flat = y[:, :self._n] if self._n_pad != self._n else y

        # scatter p x p patches back to the full grid, channels-last
        # TODO(synk): fuse this transpose into the kernel's out BlockSpec to
        # save one extra f32 HBM round-trip of the output.
        y = y_flat.reshape(B, T, h, w, p, p, self.c_out)   # (b,t,hh,ww,i,j,c)
        y = jnp.transpose(y, (0, 1, 2, 4, 3, 5, 6))        # (b,t,hh,i,ww,j,c)
        return y.reshape(B, T, self.height, self.width, self.c_out)


def _reference(x, weight, bias, patch_size, height, width, compute_dtype=None):
    """Pure-JAX reference of the PyTorch forward (eval mode)."""
    p = patch_size
    h, w = height // p, width // p
    B, T, HW, D = x.shape
    c_out = weight.shape[1]
    xf = x.reshape(B * T * h * w, D)
    wf = weight.reshape(D, c_out * p * p)                  # (c, i, j) column order
    if compute_dtype is not None:
        xf = xf.astype(compute_dtype)
        wf = wf.astype(compute_dtype)
    yf = jnp.dot(xf, wf, preferred_element_type=jnp.float32)
    yf = yf + jnp.repeat(bias, p * p)[None, :]
    y = yf.reshape(B, T, h, w, c_out, p, p)
    y = jnp.transpose(y, (0, 1, 2, 5, 3, 6, 4))
    return y.reshape(B, T, height, width, c_out).astype(x.dtype)


if __name__ == "__main__":
    # small shapes consistent with the module
    B, T = 2, 8
    d_model = 32
    c_out = 4
    patch_size = 4
    height = width = 16
    h = height // patch_size
    w = width // patch_size

    key = jax.random.PRNGKey(0)
    kx, kp = jax.random.split(key)

    x = jax.random.normal(kx, (B, T, h * w, d_model), dtype=jnp.float32)

    module = PatchRecoveryPallas(d_model, c_out, patch_size, height, width, kp)

    out = module(x)
    out = jax.block_until_ready(out)
    assert out.shape == (B, T, height, width, c_out), out.shape

    # bf16-matched reference (same input rounding, f32 accumulation): tight check
    ref_bf16 = _reference(x, module.weight, module.bias, patch_size, height,
                          width, compute_dtype=jnp.bfloat16)
    assert jnp.allclose(out, ref_bf16, atol=2e-3, rtol=2e-3), "mismatch vs bf16 reference"

    # full-f32 reference: loose check to bound bf16 drift
    ref_f32 = _reference(x, module.weight, module.bias, patch_size, height, width)
    assert jnp.allclose(out, ref_f32, atol=1e-2, rtol=1e-2), "mismatch vs f32 reference"

    print("KERNEL_OK")
</pallas_src>

<mosaic_0001>
module attributes {stable_mosaic.version = 11 : i64} {
  func.func @_copy(%arg0: i32, %arg1: memref<8x128xf32, #tpu.memory_space<vmem>>, %arg2: memref<8x128xf32, #tpu.memory_space<vmem>>) attributes {dimension_semantics = [#tpu.dimension_semantics<arbitrary>], iteration_bounds = array<i64: 1>, scalar_prefetch = 0 : i64, scratch_operands = 0 : i64, tpu.core_type = #tpu.core_type<tc>, window_params = [{pipeline_mode = #tpu.pipeline_mode<synchronous>, transform_indices = @transform_0, window_bounds = array<i64: 8, 128>}, {pipeline_mode = #tpu.pipeline_mode<synchronous>, transform_indices = @transform_1, window_bounds = array<i64: 8, 128>}]} {
    %c0 = arith.constant 0 : index
    %c0_0 = arith.constant 0 : index
    %0 = vector.load %arg1[%c0, %c0_0] : memref<8x128xf32, #tpu.memory_space<vmem>>, vector<8x128xf32>
    %c0_1 = arith.constant 0 : index
    %c0_2 = arith.constant 0 : index
    %1 = vector.load %arg2[%c0_1, %c0_2] : memref<8x128xf32, #tpu.memory_space<vmem>>, vector<8x128xf32>
    tpu.vector_store %arg2[%c0_1, %c0_2], %0 {strides = array<i32>} : memref<8x128xf32, #tpu.memory_space<vmem>>, vector<8x128xf32>,
    return
  }
  func.func @transform_0(%arg0: i32) -> (i32, i32) {
    %c0_i32 = arith.constant 0 : i32
    %c0_i32_0 = arith.constant 0 : i32
    %c0_i32_1 = arith.constant 0 : i32
    return %c0_i32, %c0_i32_0 : i32, i32
  }
  func.func @transform_1(%arg0: i32) -> (i32, i32) {
    %c0_i32 = arith.constant 0 : i32
    %c0_i32_0 = arith.constant 0 : i32
    %c0_i32_1 = arith.constant 0 : i32
    return %c0_i32, %c0_i32_0 : i32, i32
  }
}

module attributes {stable_mosaic.version = 11 : i64} {
  func.func @_proj_kernel(%arg0: i32, %arg1: i32, %arg2: memref<128x64xf32, #tpu.memory_space<vmem>>, %arg3: memref<64x128xbf16, #tpu.memory_space<vmem>>, %arg4: memref<1x128xf32, #tpu.memory_space<vmem>>, %arg5: memref<128x128xf32, #tpu.memory_space<vmem>>) attributes {dimension_semantics = [#tpu.dimension_semantics<parallel>, #tpu.dimension_semantics<parallel>], iteration_bounds = array<i64: 1, 1>, scalar_prefetch = 0 : i64, scratch_operands = 0 : i64, tpu.core_type = #tpu.core_type<tc>, window_params = [{transform_indices = @transform_0, window_bounds = array<i64: 128, 64>}, {transform_indices = @transform_1, window_bounds = array<i64: 64, 128>}, {transform_indices = @transform_2, window_bounds = array<i64: 1, 128>}, {transform_indices = @transform_3, window_bounds = array<i64: 128, 128>}]} {
    %c0 = arith.constant 0 : index
    %c0_0 = arith.constant 0 : index
    %0 = vector.load %arg2[%c0, %c0_0] : memref<128x64xf32, #tpu.memory_space<vmem>>, vector<128x64xf32>
    %1 = arith.truncf %0 : vector<128x64xf32> to vector<128x64xbf16>
    %c0_1 = arith.constant 0 : index
    %c0_2 = arith.constant 0 : index
    %2 = vector.load %arg3[%c0_1, %c0_2] : memref<64x128xbf16, #tpu.memory_space<vmem>>, vector<64x128xbf16>
    %cst = arith.constant dense<0.000000e+00> : vector<128x128xf32>
    %3 = tpu.matmul %1, %2, %cst {dimension_numbers = #tpu.dot_dimension_numbers<[1], [0], [0], [1], [0, 0, 1, 1], [], []>} : vector<128x64xbf16>, vector<64x128xbf16>, vector<128x128xf32> -> vector<128x128xf32>
    %c0_3 = arith.constant 0 : index
    %c0_4 = arith.constant 0 : index
    %4 = vector.load %arg4[%c0_3, %c0_4] : memref<1x128xf32, #tpu.memory_space<vmem>>, vector<1x128xf32>
    %5 = vector.broadcast %4 : vector<1x128xf32> to vector<128x128xf32>
    %6 = arith.addf %3, %5 : vector<128x128xf32>
    %c0_5 = arith.constant 0 : index
    %c0_6 = arith.constant 0 : index
    %7 = vector.load %arg5[%c0_5, %c0_6] : memref<128x128xf32, #tpu.memory_space<vmem>>, vector<128x128xf32>
    tpu.vector_store %arg5[%c0_5, %c0_6], %6 {strides = array<i32>} : memref<128x128xf32, #tpu.memory_space<vmem>>, vector<128x128xf32>,
    return
  }
  func.func @transform_0(%arg0: i32, %arg1: i32) -> (i32, i32) {
    %c0_i32 = arith.constant 0 : i32
    %c0_i32_0 = arith.constant 0 : i32
    return %arg0, %c0_i32 : i32, i32
  }
  func.func @transform_1(%arg0: i32, %arg1: i32) -> (i32, i32) {
    %c0_i32 = arith.constant 0 : i32
    %c0_i32_0 = arith.constant 0 : i32
    return %c0_i32, %arg1 : i32, i32
  }
  func.func @transform_2(%arg0: i32, %arg1: i32) -> (i32, i32) {
    %c0_i32 = arith.constant 0 : i32
    %c0_i32_0 = arith.constant 0 : i32
    return %c0_i32, %arg1 : i32, i32
  }
  func.func @transform_3(%arg0: i32, %arg1: i32) -> (i32, i32) {
    %c0_i32 = arith.constant 0 : i32
    return %arg0, %arg1 : i32, i32
  }
}

</mosaic_0001>

<llo_original>
// kernel: tpu_custom_call.1
$region0: #{tpu_custom_call.1}
  #allocation0 [shape = 'u32[]', space=smem, size = 0x4, offset = 0x4, fixed_abs, tag = 'smem constant byte address 0x4 - core index']
  #allocation1 [shape = 'u32[144,128]{1,0:T(1,128)}', space=vmem, size = 0x12000, scoped, tag = 'internal scratch']
  %s0 = inlined_call_operand.hbm [shape: f32[8,128], index: 0, kind: input, shape index: {}]
  %s1 = inlined_call_operand.hbm [shape: f32[8,128], index: 1, kind: output, shape index: {}]
  %s2 = sld [smem:[#allocation0]]
  $region18: #{tpu_custom_call.1} parent=0
    _
  %s4 = ssub.s32 1, %s2
  %s5 = scalar_select 0, %s4, %s2
  $region1: #{tpu_custom_call.1} parent=0
    #allocation2 [shape = 'u8[4096]{0}', space=vmem, size = 0x1000, scoped, tag = 'input window, operand 0, single buffered']
    #allocation3 [shape = 's32[1]{0}', space=sflag, size = 0x4, scoped, tag = 'scoped memory for tpu_custom_call.1']
    #allocation4 [shape = 's32[1]{0}', space=sflag, size = 0x4, scoped, tag = 'scoped memory for tpu_custom_call.1']
    #allocation5 [shape = 'u8[4096]{0}', space=vmem, size = 0x1000, scoped, tag = 'output window, operand 0, single buffered']
    %6 = vsyncpa [#allocation3], 0
    %7 = vsyncpa [#allocation4], 0
    // Predicated region
    $region2: #{tpu_custom_call.1} parent=1 // pred_check
      _
    $region3: #{tpu_custom_call.1} parent=1 // pred_check_branch
      %9 = sbr.rel (0) target = $region5
    $region4: #{tpu_custom_call.1} parent=1 // pred_region
      %s11 = ssub.s32 128, 128
      %12 = vsyncadd [#allocation3], %s11
      %s14 = sshll.u32 [#allocation2], 4
      %s15 = int_to_ptr.vmem [resolvable:$true] %s14
      %17 = dma.hbm_to_vmem [thread:$0]  %s0, 128, %s15, [#allocation3]
    $region5: #{tpu_custom_call.1} parent=1 // pred_fallthru
      _
    // Predicated region
    $region6: #{tpu_custom_call.1} parent=1 // pred_check
      _
    $region7: #{tpu_custom_call.1} parent=1 // pred_check_branch
      %19 = sbr.rel (0) target = $region9
    $region8: #{tpu_custom_call.1} parent=1 // pred_region
      %20 = dma.done [#allocation3], 128
    $region9: #{tpu_custom_call.1} parent=1 // pred_fallthru
      _
    %v21 = vld [vmem:[#allocation2] sm:$0xff]
    %22 = vst [vmem:[#allocation5] sm:$0xff] %v21
    // Predicated region
    $region10: #{tpu_custom_call.1} parent=1 // pred_check
      _
    $region11: #{tpu_custom_call.1} parent=1 // pred_check_branch
      %24 = sbr.rel (0) target = $region13
    $region12: #{tpu_custom_call.1} parent=1 // pred_region
      %s26 = ssub.s32 128, 128
      %27 = vsyncadd [#allocation4], %s26
      %s29 = sshll.u32 [#allocation5], 4
      %s30 = int_to_ptr.vmem [resolvable:$true] %s29
      %32 = dma.vmem_to_hbm [thread:$0]  %s30, 128, %s1, [#allocation4]
    $region13: #{tpu_custom_call.1} parent=1 // pred_fallthru
      _
    // Predicated region
    $region14: #{tpu_custom_call.1} parent=1 // pred_check
      _
    $region15: #{tpu_custom_call.1} parent=1 // pred_check_branch
      %34 = sbr.rel (0) target = $region17
    $region16: #{tpu_custom_call.1} parent=1 // pred_region
      %35 = dma.done [#allocation4], 128
    $region17: #{tpu_custom_call.1} parent=1 // pred_fallthru
      _
    %36 = vsyncpa [#allocation3], 1
    %37 = vsyncpa [#allocation4], 1

// kernel: tpu_custom_call.1
$region0: #{tpu_custom_call.1}
  #allocation0 [shape = 'u32[]', space=smem, size = 0x4, offset = 0x4, fixed_abs, tag = 'smem constant byte address 0x4 - core index']
  #allocation1 [shape = 'u32[144,128]{1,0:T(1,128)}', space=vmem, size = 0x12000, scoped, tag = 'internal scratch']
  %s0 = inlined_call_operand.vmem [shape: f32[128,64], index: 0, kind: input, shape index: {}]
  %s1 = inlined_call_operand.vmem [shape: bf16[64,128], index: 1, kind: input, shape index: {}]
  %s2 = inlined_call_operand.vmem [shape: f32[1,128], index: 2, kind: input, shape index: {}]
  %s3 = inlined_call_operand.hbm [shape: f32[128,128], index: 3, kind: output, shape index: {}]
  %s4 = sld [smem:[#allocation0]]
  $region22: #{tpu_custom_call.1} parent=0
    _
  %s6 = ssub.s32 1, %s4
  %s7 = scalar_select 0, %s6, %s4
  $region1: #{tpu_custom_call.1} parent=0
    #allocation2 [shape = 'u8[65536]{0}', space=vmem, size = 0x10000, scoped, tag = 'output window, operand 0, single buffered']
    #allocation3 [shape = 's32[1]{0}', space=sflag, size = 0x4, scoped, tag = 'scoped memory for tpu_custom_call.1']
    %8 = vsyncpa [#allocation3], 0
    // Predicated region
    $region2: #{tpu_custom_call.1} parent=1 // pred_check
      _
    $region3: #{tpu_custom_call.1} parent=1 // pred_check_branch
      %10 = sbr.rel (0) target = $region5
    $region4: #{tpu_custom_call.1} parent=1 // pred_region
      _
    $region5: #{tpu_custom_call.1} parent=1 // pred_fallthru
      _
    // Predicated region
    $region6: #{tpu_custom_call.1} parent=1 // pred_check
      _
    $region7: #{tpu_custom_call.1} parent=1 // pred_check_branch
      %12 = sbr.rel (0) target = $region9
    $region8: #{tpu_custom_call.1} parent=1 // pred_region
      _
    $region9: #{tpu_custom_call.1} parent=1 // pred_fallthru
      _
    // Predicated region
    $region10: #{tpu_custom_call.1} parent=1 // pred_check
      _
    $region11: #{tpu_custom_call.1} parent=1 // pred_check_branch
      %14 = sbr.rel (0) target = $region13
    $region12: #{tpu_custom_call.1} parent=1 // pred_region
      _
    $region13: #{tpu_custom_call.1} parent=1 // pred_fallthru
      _
    %v16 = vld [vmem:[%s0] sm:$0xff]
    %v17 = vld [vmem:[%s0 + $0x8] sm:$0xff]
    %v18 = vld [vmem:[%s0 + $0x10] sm:$0xff]
    %v19 = vld [vmem:[%s0 + $0x18] sm:$0xff]
    %v20 = vld [vmem:[%s0 + $0x20] sm:$0xff]
    %v21 = vld [vmem:[%s0 + $0x28] sm:$0xff]
    %v22 = vld [vmem:[%s0 + $0x30] sm:$0xff]
    %v23 = vld [vmem:[%s0 + $0x38] sm:$0xff]
    %v24 = vld [vmem:[%s0 + $0x40] sm:$0xff]
    %v25 = vld [vmem:[%s0 + $0x48] sm:$0xff]
    %v26 = vld [vmem:[%s0 + $0x50] sm:$0xff]
    %v27 = vld [vmem:[%s0 + $0x58] sm:$0xff]
    %v28 = vld [vmem:[%s0 + $0x60] sm:$0xff]
    %v29 = vld [vmem:[%s0 + $0x68] sm:$0xff]
    %v30 = vld [vmem:[%s0 + $0x70] sm:$0xff]
    %v31 = vld [vmem:[%s0 + $0x78] sm:$0xff]
    %v32 = vpack.c.bf16 %v17, %v16
    %v33 = vpack.c.bf16 %v19, %v18
    %v34 = vpack.c.bf16 %v21, %v20
    %v35 = vpack.c.bf16 %v23, %v22
    %v36 = vpack.c.bf16 %v25, %v24
    %v37 = vpack.c.bf16 %v27, %v26
    %v38 = vpack.c.bf16 %v29, %v28
    %v39 = vpack.c.bf16 %v31, %v30
    %v40 = vld [vmem:[%s1] sm:$0xf]
    %v41 = vld [vmem:[%s1 + $0x4] sm:$0xf]
    %v42 = vld [vmem:[%s1 + $0x8] sm:$0xf]
    %v43 = vld [vmem:[%s1 + $0xc] sm:$0xf]
    %v44 = vld [vmem:[%s1 + $0x10] sm:$0xf]
    %v45 = vld [vmem:[%s1 + $0x14] sm:$0xf]
    %v46 = vld [vmem:[%s1 + $0x18] sm:$0xf]
    %v47 = vld [vmem:[%s1 + $0x1c] sm:$0xf]
    %v48 = vld [vmem:[%s2] sm:$0x1]
    %v50 = vlaneseq
    %v51 = vshrl.u32 %v50, 7
    %v52 = vsub.s32 0, %v51
    %v53 = vrot.slane %v48, %v52
    %v63 = vunpack.c.l.b16 %v40
    %v64 = vunpack.c.l.b16 %v41
    %v65 = vunpack.c.l.b16 %v42
    %v66 = vunpack.c.l.b16 %v43
    %v67 = vunpack.c.l.b16 %v44
    %v68 = vunpack.c.l.b16 %v45
    %v69 = vunpack.c.l.b16 %v46
    %v70 = vunpack.c.l.b16 %v47
    %v71 = vpack.c.b16 %v64, %v63
    %v72 = vpack.c.b16 %v66, %v65
    %v73 = vpack.c.b16 %v68, %v67
    %v74 = vpack.c.b16 %v70, %v69
    %vm79 = vcmask 523264
    %v81 = vsel %vm79, %v32, 0
    %v84 = vsel %vm79, %v33, 0
    %v87 = vsel %vm79, %v34, 0
    %v90 = vsel %vm79, %v35, 0
    %v93 = vsel %vm79, %v36, 0
    %v96 = vsel %vm79, %v37, 0
    %v99 = vsel %vm79, %v38, 0
    %v102 = vsel %vm79, %v39, 0
    %104 = vmatprep.subr.bf16.mxu0 0
    %105 = vmatpush1.bf16.msra.mxu0 %v71
    %106 = vmatprep.subr.bf16.mxu0 0
    %107 = vmatpush1.bf16.msra.mxu0 %v72
    %108 = vmatprep.subr.bf16.mxu0 0
    %109 = vmatpush1.bf16.msra.mxu0 %v73
    %110 = vmatprep.subr.bf16.mxu0 0
    %111 = vmatpush1.bf16.msra.mxu0 %v74
    %112 = vmatprep.subr.bf16.mxu0 0
    %113 = vmatpush1.bf16.msra.mxu0 0
    %114 = vmatprep.subr.bf16.mxu0 0
    %115 = vmatpush1.bf16.msra.mxu0 0
    %116 = vmatprep.subr.bf16.mxu0 0
    %117 = vmatpush1.bf16.msra.mxu0 0
    %118 = vmatprep.subr.bf16.mxu0 0
    %119 = vmatpush1.bf16.msra.mxu0 0
    %120 = vmatprep.subr.bf16.mxu0 0
    %121 = vmatpush1.bf16.msra.mxu0 0
    %122 = vmatprep.subr.bf16.mxu0 0
    %123 = vmatpush1.bf16.msra.mxu0 0
    %124 = vmatprep.subr.bf16.mxu0 0
    %125 = vmatpush1.bf16.msra.mxu0 0
    %126 = vmatprep.subr.bf16.mxu0 0
    %127 = vmatpush1.bf16.msra.mxu0 0
    %128 = vmatprep.subr.bf16.mxu0 0
    %129 = vmatpush1.bf16.msra.mxu0 0
    %130 = vmatprep.subr.bf16.mxu0 0
    %131 = vmatpush1.bf16.msra.mxu0 0
    %132 = vmatprep.subr.bf16.mxu0 0
    %133 = vmatpush1.bf16.msra.mxu0 0
    %134 = vmatprep.subr.bf16.mxu0 0
    %135 = vmatpush1.bf16.msra.mxu0 0
    %136 = vmatprep.mubr.bf16.mxu0 0
    %137 = vmatmul.mubr.bf16.gmra.mrb[0].mxu0 %v81
    %v138 = vpop.f32.mrb[0].mxu0
    %v139 = vadd.f32 %v53, %v138
    %v140 = vpop.f32.mrb[0].mxu0
    %v141 = vpop.f32.mrb[0].mxu0
    %v142 = vadd.f32 %v53, %v141
    %v143 = vpop.f32.mrb[0].mxu0
    %144 = vmatprep.mubr.bf16.mxu0 0
    %145 = vmatmul.mubr.bf16.gmra.mrb[0].mxu0 %v84
    %v146 = vpop.f32.mrb[0].mxu0
    %v147 = vadd.f32 %v53, %v146
    %v148 = vpop.f32.mrb[0].mxu0
    %v149 = vpop.f32.mrb[0].mxu0
    %v150 = vadd.f32 %v53, %v149
    %v151 = vpop.f32.mrb[0].mxu0
    %152 = vmatprep.mubr.bf16.mxu0 0
    %153 = vmatmul.mubr.bf16.gmra.mrb[0].mxu0 %v87
    %v154 = vpop.f32.mrb[0].mxu0
    %v155 = vadd.f32 %v53, %v154
    %v156 = vpop.f32.mrb[0].mxu0
    %v157 = vpop.f32.mrb[0].mxu0
    %v158 = vadd.f32 %v53, %v157
    %v159 = vpop.f32.mrb[0].mxu0
    %160 = vmatprep.mubr.bf16.mxu0 0
    %161 = vmatmul.mubr.bf16.gmra.mrb[0].mxu0 %v90
    %v162 = vpop.f32.mrb[0].mxu0
    %v163 = vadd.f32 %v53, %v162
    %v164 = vpop.f32.mrb[0].mxu0
    %v165 = vpop.f32.mrb[0].mxu0
    %v166 = vadd.f32 %v53, %v165
    %v167 = vpop.f32.mrb[0].mxu0
    %168 = vmatprep.mubr.bf16.mxu0 0
    %169 = vmatmul.mubr.bf16.gmra.mrb[0].mxu0 %v93
    %v170 = vpop.f32.mrb[0].mxu0
    %v171 = vadd.f32 %v53, %v170
    %v172 = vpop.f32.mrb[0].mxu0
    %v173 = vpop.f32.mrb[0].mxu0
    %v174 = vadd.f32 %v53, %v173
    %v175 = vpop.f32.mrb[0].mxu0
    %176 = vmatprep.mubr.bf16.mxu0 0
    %177 = vmatmul.mubr.bf16.gmra.mrb[0].mxu0 %v96
    %v178 = vpop.f32.mrb[0].mxu0
    %v179 = vadd.f32 %v53, %v178
    %v180 = vpop.f32.mrb[0].mxu0
    %v181 = vpop.f32.mrb[0].mxu0
    %v182 = vadd.f32 %v53, %v181
    %v183 = vpop.f32.mrb[0].mxu0
    %184 = vmatprep.mubr.bf16.mxu0 0
    %185 = vmatmul.mubr.bf16.gmra.mrb[0].mxu0 %v99
    %v186 = vpop.f32.mrb[0].mxu0
    %v187 = vadd.f32 %v53, %v186
    %v188 = vpop.f32.mrb[0].mxu0
    %v189 = vpop.f32.mrb[0].mxu0
    %v190 = vadd.f32 %v53, %v189
    %v191 = vpop.f32.mrb[0].mxu0
    %192 = vmatprep.mubr.bf16.mxu0 0
    %193 = vmatmul.mubr.bf16.gmra.mrb[0].mxu0 %v102
    %v194 = vpop.f32.mrb[0].mxu0
    %v195 = vadd.f32 %v53, %v194
    %v196 = vpop.f32.mrb[0].mxu0
    %v197 = vpop.f32.mrb[0].mxu0
    %v198 = vadd.f32 %v53, %v197
    %v199 = vpop.f32.mrb[0].mxu0
    %200 = vdwg.mxu0
    %201 = vst [vmem:[#allocation2] sm:$0xff] %v139
    %202 = vst [vmem:[#allocation2 + $0x8] sm:$0xff] %v142
    %203 = vst [vmem:[#allocation2 + $0x10] sm:$0xff] %v147
    %204 = vst [vmem:[#allocation2 + $0x18] sm:$0xff] %v150
    %205 = vst [vmem:[#allocation2 + $0x20] sm:$0xff] %v155
    %206 = vst [vmem:[#allocation2 + $0x28] sm:$0xff] %v158
    %207 = vst [vmem:[#allocation2 + $0x30] sm:$0xff] %v163
    %208 = vst [vmem:[#allocation2 + $0x38] sm:$0xff] %v166
    %209 = vst [vmem:[#allocation2 + $0x40] sm:$0xff] %v171
    %210 = vst [vmem:[#allocation2 + $0x48] sm:$0xff] %v174
    %211 = vst [vmem:[#allocation2 + $0x50] sm:$0xff] %v179
    %212 = vst [vmem:[#allocation2 + $0x58] sm:$0xff] %v182
    %213 = vst [vmem:[#allocation2 + $0x60] sm:$0xff] %v187
    %214 = vst [vmem:[#allocation2 + $0x68] sm:$0xff] %v190
    %215 = vst [vmem:[#allocation2 + $0x70] sm:$0xff] %v195
    %216 = vst [vmem:[#allocation2 + $0x78] sm:$0xff] %v198
    // Predicated region
    $region14: #{tpu_custom_call.1} parent=1 // pred_check
      _
    $region15: #{tpu_custom_call.1} parent=1 // pred_check_branch
      %218 = sbr.rel (0) target = $region17
    $region16: #{tpu_custom_call.1} parent=1 // pred_region
      %s220 = ssub.s32 2048, 2048
      %221 = vsyncadd [#allocation3], %s220
      %s222 = sshll.u32 [#allocation2], 4
      %s223 = int_to_ptr.vmem [resolvable:$true] %s222
      %228 = dma.vmem_to_hbm [thread:$0]  %s223, 2048, %s3, [#allocation3], 128, 128, 8
    $region17: #{tpu_custom_call.1} parent=1 // pred_fallthru
      _
    // Predicated region
    $region18: #{tpu_custom_call.1} parent=1 // pred_check
      _
    $region19: #{tpu_custom_call.1} parent=1 // pred_check_branch
      %230 = sbr.rel (0) target = $region21
    $region20: #{tpu_custom_call.1} parent=1 // pred_region
      %231 = dma.done [#allocation3], 2048
    $region21: #{tpu_custom_call.1} parent=1 // pred_fallthru
      _
    %232 = vsyncpa [#allocation3], 1

</llo_original>
